<compile_context>
chip_gen: v7x
topology: tpu7x:2x2x1
jax: 0.10.0
libtpu: 0.0.40
codegen_flags: <defaults>
</compile_context>

<pallas_src>
import functools

import jax
import jax.numpy as jnp
from jax import lax
from jax.experimental import pallas as pl
from jax.experimental.pallas import tpu as pltpu


def _round_up(x, m):
    return (x + m - 1) // m * m


def _pick_batch_tile(batch, d, target_rows=256):
    """Largest divisor of `batch` whose X0 row tile (tb*d) is 8-sublane aligned
    (or the full extent) and <= target_rows; prefer >=2 grid steps only when
    each step still has >=128 MXU rows."""
    divisors = [t for t in range(1, batch + 1) if batch % t == 0]
    valid = [t for t in divisors if (t * d) % 8 == 0 or t == batch]
    fitting = [t for t in valid if t * d <= target_rows] or [min(valid)]
    tb = max(fitting)
    if batch // tb < 2:
        alt = [t for t in fitting if batch // t >= 2 and t * d >= 128]
        if alt:
            tb = max(alt)
    return tb


def _pick_col_tile(n_pad, max_cols=512):
    """Column tile of M / xsum: full n_pad when small, otherwise the largest
    128-multiple divisor of n_pad that is <= max_cols."""
    if n_pad <= max_cols:
        return n_pad
    q = n_pad // 128
    best = 1
    for r in range(1, max_cols // 128 + 1):
        if q % r == 0:
            best = r
    return best * 128


def _gwnet_kernel(x_ref, m_ref, wt_ref, out_ref, *, num_a, tb, d, tn, out_pad):
    """One grid step: `tb` batches x one column tile of the combined support.

    x_ref   : (tb*d, n_pad)      row tile of X0 (full contraction width)
    m_ref   : (n_pad, tn)        column tile of the combined support M
    wt_ref  : (out_pad, d)       W^T (constant index_map -> stays resident)
    out_ref : (tb, out_pad, tn)  lane-dense output tile (lane dim = tn)
    """
    x = x_ref[...]                                          # (tb*d, n_pad)
    if tn == x.shape[-1]:
        x_cols = x                                          # single column tile
    else:
        col0 = pl.multiple_of(pl.program_id(0) * tn, 128)
        x_cols = x_ref[:, pl.ds(col0, tn)]                  # identity-term slice

    # Folded propagation: xsum = (1 - K) * X0 + X0 @ M  (one MXU matmul,
    # f32 accumulation, no serial x1 -> x2 chain).
    xsum = (1.0 - num_a) * x_cols.astype(jnp.float32) + jnp.dot(
        x, m_ref[...], preferred_element_type=jnp.float32)  # (tb*d, tn)

    wt = wt_ref[...]                                        # (out_pad, d)
    if d % 8 == 0:
        # Single batched contraction over d ('od,bdn->bon').  The reshape is a
        # pure vreg regrouping because d is sublane aligned.
        xsum3 = xsum.reshape(tb, d, tn)
        wt_b = jnp.broadcast_to(wt, (tb, out_pad, d))
        out_ref[...] = lax.dot_general(
            wt_b, xsum3,
            dimension_numbers=(((2,), (1,)), ((0,), (0,))),
            preferred_element_type=jnp.float32)
    else:
        # Fallback for sublane-misaligned d: per-batch dots (avoids a
        # relayouting reshape of xsum).
        for b in range(tb):
            out_ref[b] = jnp.dot(wt, xsum[b * d:(b + 1) * d, :],
                                 preferred_element_type=jnp.float32)


def graph_wavenet_convolution(a_stack, x, z, w, *, target_rows=256,
                              col_tile=512, use_bf16_inputs=False):
    """a_stack: (K, n, n); x: (batch, d, n); z: (n, dz); w: (d, out).

    Returns (batch, n, out) matching the PyTorch module's batched forward.
    """
    # TODO(synk): only the batched (3-D X) path of the module is implemented.
    num_a, n, _ = a_stack.shape
    batch, d, n_x = x.shape
    assert n_x == n
    out_features = w.shape[1]

    lane = 128
    n_pad = _round_up(n, lane)             # lane dim of X0 / M / out tiles
    out_pad = _round_up(out_features, 8)   # sublane dim of the out block

    # ---- One-time prologue (exact-f32 dots; hoist/cache if A, Z are static).
    # M = sum_k (Ak^T + 2 (Ak@Ak)^T) + Az^T,  Az = softmax(relu(ZZ^T), 0).
    hi = lax.Precision.HIGHEST
    a2 = jnp.einsum("kij,kjl->kil", a_stack, a_stack, precision=hi)   # Ak @ Ak
    p = jnp.sum(a_stack + 2.0 * a2, axis=0)                           # (n, n)
    s = jnp.maximum(jnp.dot(z, z.T, precision=hi), 0.0)
    az_t = jax.nn.softmax(s, axis=-1)    # relu(ZZ^T) symmetric => softmax(.,0)^T
    m = p.T + az_t                                                    # (n, n)

    # ---- Lane-/sublane-pad; optional bf16 MXU inputs for the big matmul.
    in_dtype = jnp.bfloat16 if use_bf16_inputs else jnp.float32
    itemsize = 2 if use_bf16_inputs else 4
    m_pad = jnp.zeros((n_pad, n_pad), in_dtype).at[:n, :n].set(m.astype(in_dtype))
    x_pad = jnp.zeros((batch * d, n_pad), in_dtype).at[:, :n].set(
        x.reshape(batch * d, n).astype(in_dtype))
    wt_pad = jnp.zeros((out_pad, d), jnp.float32).at[:out_features, :].set(
        w.T.astype(jnp.float32))

    # ---- Tile selection & grid (columns outer, batch inner: the large M tile
    #      is fetched once per column step; the small X0 tile is re-streamed).
    tb = _pick_batch_tile(batch, d, target_rows)
    tn = _pick_col_tile(n_pad, col_tile)
    grid = (n_pad // tn, batch // tb)

    kernel = functools.partial(_gwnet_kernel, num_a=num_a, tb=tb, d=d, tn=tn,
                               out_pad=out_pad)

    flops = 2 * batch * d * n_pad * n_pad + 2 * batch * out_pad * d * n_pad
    bytes_accessed = (x_pad.size * itemsize + m_pad.size * itemsize
                      + wt_pad.size * 4 + batch * out_pad * n_pad * 4)
    vmem_need = (2 * tb * d * n_pad * itemsize       # X0 tile (double-buffered)
                 + 2 * n_pad * tn * itemsize         # M tile  (double-buffered)
                 + 2 * tb * out_pad * tn * 4         # out tile (double-buffered)
                 + 2 * out_pad * d * 4)              # W^T
    vmem_limit = int(min(max(32 << 20, 2 * vmem_need), 100 << 20))

    out_padded = pl.pallas_call(
        kernel,
        out_shape=jax.ShapeDtypeStruct((batch, out_pad, n_pad), jnp.float32),
        grid_spec=pltpu.PrefetchScalarGridSpec(
            num_scalar_prefetch=0,
            grid=grid,
            in_specs=[
                pl.BlockSpec((tb * d, n_pad), lambda j, i: (i, 0)),   # X0 rows
                pl.BlockSpec((n_pad, tn), lambda j, i: (0, j)),       # M columns
                pl.BlockSpec((out_pad, d), lambda j, i: (0, 0)),      # W^T
            ],
            out_specs=pl.BlockSpec((tb, out_pad, tn), lambda j, i: (i, 0, j)),
        ),
        compiler_params=pltpu.CompilerParams(
            dimension_semantics=("parallel", "parallel"),
            vmem_limit_bytes=vmem_limit,
        ),
        cost_estimate=pl.CostEstimate(
            flops=int(flops), transcendentals=0,
            bytes_accessed=int(bytes_accessed)),
    )(x_pad, m_pad, wt_pad)

    # (batch, out_pad, n_pad) -> drop padding -> (batch, n, out).
    return jnp.transpose(out_padded[:, :out_features, :n], (0, 2, 1))


def _reference(a_stack, x, z, w):
    """Pure-JAX mirror of the PyTorch forward (batched path)."""
    batch, d, n = x.shape
    hi = lax.Precision.HIGHEST
    x0 = x.reshape(-1, n)
    xsum = x0
    for k in range(a_stack.shape[0]):
        ak = a_stack[k]
        x1 = jnp.dot(ak, x0.T, precision=hi).T
        x2 = 2.0 * jnp.dot(ak, x1.T, precision=hi).T - x0
        xsum = xsum + x1 + x2
    az = jax.nn.softmax(jnp.maximum(jnp.dot(z, z.T, precision=hi), 0.0), axis=0)
    xsum = xsum + jnp.dot(az, x0.T, precision=hi).T
    xs = xsum.reshape(batch, d, n).transpose(0, 2, 1)
    return jnp.dot(xs, w, precision=hi)


if __name__ == "__main__":
    key = jax.random.PRNGKey(0)
    k_a, k_x, k_z, k_w = jax.random.split(key, 4)

    batch, d, n, dz, out_features, num_a = 2, 8, 16, 8, 32, 2

    # Normalized (row-stochastic) adjacency matrices.
    raw = jax.random.uniform(k_a, (num_a, n, n), dtype=jnp.float32)
    a_stack = raw / jnp.sum(raw, axis=-1, keepdims=True)

    x = jax.random.normal(k_x, (batch, d, n), dtype=jnp.float32)
    z = jax.random.normal(k_z, (n, dz), dtype=jnp.float32)

    # W ~ U(-stdv, stdv), stdv = 1/sqrt(out_features), in_features = d.
    stdv = 1.0 / jnp.sqrt(jnp.float32(out_features))
    w = jax.random.uniform(
        k_w, (d, out_features), dtype=jnp.float32, minval=-stdv, maxval=stdv
    )

    out = graph_wavenet_convolution(a_stack, x, z, w)
    out = jax.block_until_ready(out)

    ref = _reference(a_stack, x, z, w)
    assert out.shape == (batch, n, out_features)
    assert jnp.allclose(out, ref, atol=1e-4, rtol=1e-4), "mismatch vs reference"

    print("KERNEL_OK")
</pallas_src>

<mosaic_0001>
module attributes {stable_mosaic.version = 11 : i64} {
  func.func @_gwnet_kernel(%arg0: i32, %arg1: i32, %arg2: memref<16x128xf32, #tpu.memory_space<vmem>>, %arg3: memref<128x128xf32, #tpu.memory_space<vmem>>, %arg4: memref<32x8xf32, #tpu.memory_space<vmem>>, %arg5: memref<2x32x128xf32, #tpu.memory_space<vmem>>) attributes {dimension_semantics = [#tpu.dimension_semantics<parallel>, #tpu.dimension_semantics<parallel>], iteration_bounds = array<i64: 1, 1>, scalar_prefetch = 0 : i64, scratch_operands = 0 : i64, tpu.core_type = #tpu.core_type<tc>, window_params = [{transform_indices = @transform_0, window_bounds = array<i64: 16, 128>}, {transform_indices = @transform_1, window_bounds = array<i64: 128, 128>}, {pipeline_mode = #tpu.pipeline_mode<synchronous>, transform_indices = @transform_2, window_bounds = array<i64: 32, 8>}, {transform_indices = @transform_3, window_bounds = array<i64: 2, 32, 128>}]} {
    %c0 = arith.constant 0 : index
    %c0_0 = arith.constant 0 : index
    %0 = vector.load %arg2[%c0, %c0_0] : memref<16x128xf32, #tpu.memory_space<vmem>>, vector<16x128xf32>
    %cst = arith.constant -1.000000e+00 : f32
    %1 = vector.broadcast %cst : f32 to vector<16x128xf32>
    %2 = arith.mulf %1, %0 : vector<16x128xf32>
    %c0_1 = arith.constant 0 : index
    %c0_2 = arith.constant 0 : index
    %3 = vector.load %arg3[%c0_1, %c0_2] : memref<128x128xf32, #tpu.memory_space<vmem>>, vector<128x128xf32>
    %cst_3 = arith.constant dense<0.000000e+00> : vector<16x128xf32>
    %4 = tpu.matmul %0, %3, %cst_3 {dimension_numbers = #tpu.dot_dimension_numbers<[1], [0], [0], [1], [0, 0, 1, 1], [], []>} : vector<16x128xf32>, vector<128x128xf32>, vector<16x128xf32> -> vector<16x128xf32>
    %5 = arith.addf %2, %4 : vector<16x128xf32>
    %c0_4 = arith.constant 0 : index
    %c0_5 = arith.constant 0 : index
    %6 = vector.load %arg4[%c0_4, %c0_5] : memref<32x8xf32, #tpu.memory_space<vmem>>, vector<32x8xf32>
    %7 = vector.shape_cast %5 : vector<16x128xf32> to vector<2x8x128xf32>
    %8 = vector.shape_cast %6 : vector<32x8xf32> to vector<1x32x8xf32>
    %9 = vector.broadcast %8 : vector<1x32x8xf32> to vector<2x32x8xf32>
    %cst_6 = arith.constant dense<0.000000e+00> : vector<2x32x128xf32>
    %10 = tpu.matmul %9, %7, %cst_6 {dimension_numbers = #tpu.dot_dimension_numbers<[2], [1], [1], [2], [0, 0, 0, 1, 1, 2], [0], [0]>} : vector<2x32x8xf32>, vector<2x8x128xf32>, vector<2x32x128xf32> -> vector<2x32x128xf32>
    %c0_7 = arith.constant 0 : index
    %c0_8 = arith.constant 0 : index
    %c0_9 = arith.constant 0 : index
    %11 = vector.load %arg5[%c0_7, %c0_8, %c0_9] : memref<2x32x128xf32, #tpu.memory_space<vmem>>, vector<2x32x128xf32>
    tpu.vector_store %arg5[%c0_7, %c0_8, %c0_9], %10 {strides = array<i32>} : memref<2x32x128xf32, #tpu.memory_space<vmem>>, vector<2x32x128xf32>,
    return
  }
  func.func @transform_0(%arg0: i32, %arg1: i32) -> (i32, i32) {
    %c0_i32 = arith.constant 0 : i32
    %c0_i32_0 = arith.constant 0 : i32
    return %arg1, %c0_i32 : i32, i32
  }
  func.func @transform_1(%arg0: i32, %arg1: i32) -> (i32, i32) {
    %c0_i32 = arith.constant 0 : i32
    %c0_i32_0 = arith.constant 0 : i32
    return %c0_i32, %arg0 : i32, i32
  }
  func.func @transform_2(%arg0: i32, %arg1: i32) -> (i32, i32) {
    %c0_i32 = arith.constant 0 : i32
    %c0_i32_0 = arith.constant 0 : i32
    %c0_i32_1 = arith.constant 0 : i32
    return %c0_i32, %c0_i32_0 : i32, i32
  }
  func.func @transform_3(%arg0: i32, %arg1: i32) -> (i32, i32, i32) {
    %c0_i32 = arith.constant 0 : i32
    %c0_i32_0 = arith.constant 0 : i32
    return %arg1, %c0_i32, %arg0 : i32, i32, i32
  }
}

</mosaic_0001>

<llo_original>
// kernel: tpu_custom_call.1
$region0: #{tpu_custom_call.1}
  #allocation0 [shape = 'u32[]', space=smem, size = 0x4, offset = 0x4, fixed_abs, tag = 'smem constant byte address 0x4 - core index']
  #allocation1 [shape = 'u32[144,128]{1,0:T(1,128)}', space=vmem, size = 0x12000, scoped, tag = 'internal scratch']
  %s0 = inlined_call_operand.vmem [shape: f32[16,128], index: 0, kind: input, shape index: {}]
  %s1 = inlined_call_operand.hbm [shape: f32[128,128], index: 1, kind: input, shape index: {}]
  %s2 = inlined_call_operand.vmem [shape: f32[32,8], index: 2, kind: input, shape index: {}]
  %s3 = inlined_call_operand.hbm [shape: f32[2,32,128], index: 3, kind: output, shape index: {}]
  %s4 = sld [smem:[#allocation0]]
  $region26: #{tpu_custom_call.1} parent=0
    _
  %s6 = ssub.s32 1, %s4
  %s7 = scalar_select 0, %s6, %s4
  $region1: #{tpu_custom_call.1} parent=0
    #allocation2 [shape = 'u8[65536]{0}', space=vmem, size = 0x10000, scoped, tag = 'input window, operand 1, single buffered']
    #allocation3 [shape = 's32[1]{0}', space=sflag, size = 0x4, scoped, tag = 'scoped memory for tpu_custom_call.1']
    #allocation4 [shape = 's32[1]{0}', space=sflag, size = 0x4, scoped, tag = 'scoped memory for tpu_custom_call.1']
    #allocation5 [shape = 'u8[32768]{0}', space=vmem, size = 0x8000, scoped, tag = 'output window, operand 0, single buffered']
    %8 = vsyncpa [#allocation3], 0
    %9 = vsyncpa [#allocation4], 0
    // Predicated region
    $region2: #{tpu_custom_call.1} parent=1 // pred_check
      _
    $region3: #{tpu_custom_call.1} parent=1 // pred_check_branch
      %11 = sbr.rel (0) target = $region5
    $region4: #{tpu_custom_call.1} parent=1 // pred_region
      _
    $region5: #{tpu_custom_call.1} parent=1 // pred_fallthru
      _
    // Predicated region
    $region6: #{tpu_custom_call.1} parent=1 // pred_check
      _
    $region7: #{tpu_custom_call.1} parent=1 // pred_check_branch
      %13 = sbr.rel (0) target = $region9
    $region8: #{tpu_custom_call.1} parent=1 // pred_region
      %s15 = ssub.s32 2048, 2048
      %16 = vsyncadd [#allocation3], %s15
      %s17 = sshll.u32 [#allocation2], 4
      %s18 = int_to_ptr.vmem [resolvable:$true] %s17
      %23 = dma.hbm_to_vmem [thread:$0]  %s1, 2048, %s18, [#allocation3], 128, 128, 8
    $region9: #{tpu_custom_call.1} parent=1 // pred_fallthru
      _
    // Predicated region
    $region10: #{tpu_custom_call.1} parent=1 // pred_check
      _
    $region11: #{tpu_custom_call.1} parent=1 // pred_check_branch
      %25 = sbr.rel (0) target = $region13
    $region12: #{tpu_custom_call.1} parent=1 // pred_region
      _
    $region13: #{tpu_custom_call.1} parent=1 // pred_fallthru
      _
    // Predicated region
    $region14: #{tpu_custom_call.1} parent=1 // pred_check
      _
    $region15: #{tpu_custom_call.1} parent=1 // pred_check_branch
      %27 = sbr.rel (0) target = $region17
    $region16: #{tpu_custom_call.1} parent=1 // pred_region
      %28 = dma.done [#allocation3], 2048
    $region17: #{tpu_custom_call.1} parent=1 // pred_fallthru
      _
    %v29 = vld [vmem:[%s0] sm:$0xff]
    %v30 = vld [vmem:[%s0 + $0x8] sm:$0xff]
    %v31 = vmul.f32 %v29, -1.0
    %v32 = vmul.f32 %v30, -1.0
    %v33 = vld [vmem:[#allocation2] sm:$0xff]
    %v34 = vld [vmem:[#allocation2 + $0x8] sm:$0xff]
    %v35 = vld [vmem:[#allocation2 + $0x10] sm:$0xff]
    %v36 = vld [vmem:[#allocation2 + $0x18] sm:$0xff]
    %v37 = vld [vmem:[#allocation2 + $0x20] sm:$0xff]
    %v38 = vld [vmem:[#allocation2 + $0x28] sm:$0xff]
    %v39 = vld [vmem:[#allocation2 + $0x30] sm:$0xff]
    %v40 = vld [vmem:[#allocation2 + $0x38] sm:$0xff]
    %v41 = vld [vmem:[#allocation2 + $0x40] sm:$0xff]
    %v42 = vld [vmem:[#allocation2 + $0x48] sm:$0xff]
    %v43 = vld [vmem:[#allocation2 + $0x50] sm:$0xff]
    %v44 = vld [vmem:[#allocation2 + $0x58] sm:$0xff]
    %v45 = vld [vmem:[#allocation2 + $0x60] sm:$0xff]
    %v46 = vld [vmem:[#allocation2 + $0x68] sm:$0xff]
    %v47 = vld [vmem:[#allocation2 + $0x70] sm:$0xff]
    %v48 = vld [vmem:[#allocation2 + $0x78] sm:$0xff]
    %49 = vmatprep.subr.mxu0 0.0
    %50 = vmatpush1.msra.mxu0 %v33
    %51 = vmatprep.subr.mxu0 0.0
    %52 = vmatpush1.msra.mxu0 %v34
    %53 = vmatprep.subr.mxu0 0.0
    %54 = vmatpush1.msra.mxu0 %v35
    %55 = vmatprep.subr.mxu0 0.0
    %56 = vmatpush1.msra.mxu0 %v36
    %57 = vmatprep.subr.mxu0 0.0
    %58 = vmatpush1.msra.mxu0 %v37
    %59 = vmatprep.subr.mxu0 0.0
    %60 = vmatpush1.msra.mxu0 %v38
    %61 = vmatprep.subr.mxu0 0.0
    %62 = vmatpush1.msra.mxu0 %v39
    %63 = vmatprep.subr.mxu0 0.0
    %64 = vmatpush1.msra.mxu0 %v40
    %65 = vmatprep.subr.mxu0 0.0
    %66 = vmatpush1.msra.mxu0 %v41
    %67 = vmatprep.subr.mxu0 0.0
    %68 = vmatpush1.msra.mxu0 %v42
    %69 = vmatprep.subr.mxu0 0.0
    %70 = vmatpush1.msra.mxu0 %v43
    %71 = vmatprep.subr.mxu0 0.0
    %72 = vmatpush1.msra.mxu0 %v44
    %73 = vmatprep.subr.mxu0 0.0
    %74 = vmatpush1.msra.mxu0 %v45
    %75 = vmatprep.subr.mxu0 0.0
    %76 = vmatpush1.msra.mxu0 %v46
    %77 = vmatprep.subr.mxu0 0.0
    %78 = vmatpush1.msra.mxu0 %v47
    %79 = vmatprep.subr.mxu0 0.0
    %80 = vmatpush1.msra.mxu0 %v48
    %81 = vmatprep.subr.mxu0 0.0
    %82 = vmatpush1.msra.mxu0 0.0
    %83 = vmatprep.subr.mxu0 0.0
    %84 = vmatpush1.msra.mxu0 0.0
    %85 = vmatprep.subr.mxu0 0.0
    %86 = vmatpush1.msra.mxu0 0.0
    %87 = vmatprep.subr.mxu0 0.0
    %88 = vmatpush1.msra.mxu0 0.0
    %89 = vmatprep.subr.mxu0 0.0
    %90 = vmatpush1.msra.mxu0 0.0
    %91 = vmatprep.subr.mxu0 0.0
    %92 = vmatpush1.msra.mxu0 0.0
    %93 = vmatprep.subr.mxu0 0.0
    %94 = vmatpush1.msra.mxu0 0.0
    %95 = vmatprep.subr.mxu0 0.0
    %96 = vmatpush1.msra.mxu0 0.0
    %97 = vmatprep.subr.mxu0 0.0
    %98 = vmatpush1.msra.mxu0 0.0
    %99 = vmatprep.subr.mxu0 0.0
    %100 = vmatpush1.msra.mxu0 0.0
    %101 = vmatprep.subr.mxu0 0.0
    %102 = vmatpush1.msra.mxu0 0.0
    %103 = vmatprep.subr.mxu0 0.0
    %104 = vmatpush1.msra.mxu0 0.0
    %105 = vmatprep.subr.mxu0 0.0
    %106 = vmatpush1.msra.mxu0 0.0
    %107 = vmatprep.subr.mxu0 0.0
    %108 = vmatpush1.msra.mxu0 0.0
    %109 = vmatprep.subr.mxu0 0.0
    %110 = vmatpush1.msra.mxu0 0.0
    %111 = vmatprep.subr.mxu0 0.0
    %112 = vmatpush1.msra.mxu0 0.0
    %113 = vmatprep.mubr.f32.mxu0 0.0
    %114 = vmatmul.mubr.f32.gmra.mrb[0].mxu0 %v29
    %v115 = vpop.f32.mrb[0].mxu0
    %v116 = vadd.f32 0.0, %v115
    %v117 = vpop.f32.mrb[0].mxu0
    %118 = vmatprep.mubr.f32.mxu0 0.0
    %119 = vmatmul.mubr.f32.gmra.mrb[0].mxu0 %v30
    %v120 = vpop.f32.mrb[0].mxu0
    %v121 = vadd.f32 0.0, %v120
    %v122 = vpop.f32.mrb[0].mxu0
    %123 = vdwg.mxu0
    %v124 = vadd.f32 %v31, %v116
    %v125 = vadd.f32 %v32, %v121
    %v126 = vld [vmem:[%s2] sm:$0xff]
    %v127 = vld [vmem:[%s2 + $0x8] sm:$0xff]
    %v128 = vld [vmem:[%s2 + $0x10] sm:$0xff]
    %v129 = vld [vmem:[%s2 + $0x18] sm:$0xff]
    %vm130 = vcmask 64512
    %v132 = vsel %vm130, %v126, 0
    %v135 = vsel %vm130, %v127, 0
    %v138 = vsel %vm130, %v128, 0
    %v141 = vsel %vm130, %v129, 0
    %143 = vmatprep.subr.mxu0 0.0
    %144 = vmatpush1.msra.mxu0 %v124
    %145 = vmatprep.subr.mxu0 0.0
    %146 = vmatpush1.msra.mxu0 0.0
    %147 = vmatprep.subr.mxu0 0.0
    %148 = vmatpush1.msra.mxu0 0.0
    %149 = vmatprep.subr.mxu0 0.0
    %150 = vmatpush1.msra.mxu0 0.0
    %151 = vmatprep.subr.mxu0 0.0
    %152 = vmatpush1.msra.mxu0 0.0
    %153 = vmatprep.subr.mxu0 0.0
    %154 = vmatpush1.msra.mxu0 0.0
    %155 = vmatprep.subr.mxu0 0.0
    %156 = vmatpush1.msra.mxu0 0.0
    %157 = vmatprep.subr.mxu0 0.0
    %158 = vmatpush1.msra.mxu0 0.0
    %159 = vmatprep.subr.mxu0 0.0
    %160 = vmatpush1.msra.mxu0 0.0
    %161 = vmatprep.subr.mxu0 0.0
    %162 = vmatpush1.msra.mxu0 0.0
    %163 = vmatprep.subr.mxu0 0.0
    %164 = vmatpush1.msra.mxu0 0.0
    %165 = vmatprep.subr.mxu0 0.0
    %166 = vmatpush1.msra.mxu0 0.0
    %167 = vmatprep.subr.mxu0 0.0
    %168 = vmatpush1.msra.mxu0 0.0
    %169 = vmatprep.subr.mxu0 0.0
    %170 = vmatpush1.msra.mxu0 0.0
    %171 = vmatprep.subr.mxu0 0.0
    %172 = vmatpush1.msra.mxu0 0.0
    %173 = vmatprep.subr.mxu0 0.0
    %174 = vmatpush1.msra.mxu0 0.0
    %175 = vmatprep.subr.mxu0 0.0
    %176 = vmatpush1.msra.mxu0 0.0
    %177 = vmatprep.subr.mxu0 0.0
    %178 = vmatpush1.msra.mxu0 0.0
    %179 = vmatprep.subr.mxu0 0.0
    %180 = vmatpush1.msra.mxu0 0.0
    %181 = vmatprep.subr.mxu0 0.0
    %182 = vmatpush1.msra.mxu0 0.0
    %183 = vmatprep.subr.mxu0 0.0
    %184 = vmatpush1.msra.mxu0 0.0
    %185 = vmatprep.subr.mxu0 0.0
    %186 = vmatpush1.msra.mxu0 0.0
    %187 = vmatprep.subr.mxu0 0.0
    %188 = vmatpush1.msra.mxu0 0.0
    %189 = vmatprep.subr.mxu0 0.0
    %190 = vmatpush1.msra.mxu0 0.0
    %191 = vmatprep.subr.mxu0 0.0
    %192 = vmatpush1.msra.mxu0 0.0
    %193 = vmatprep.subr.mxu0 0.0
    %194 = vmatpush1.msra.mxu0 0.0
    %195 = vmatprep.subr.mxu0 0.0
    %196 = vmatpush1.msra.mxu0 0.0
    %197 = vmatprep.subr.mxu0 0.0
    %198 = vmatpush1.msra.mxu0 0.0
    %199 = vmatprep.subr.mxu0 0.0
    %200 = vmatpush1.msra.mxu0 0.0
    %201 = vmatprep.subr.mxu0 0.0
    %202 = vmatpush1.msra.mxu0 0.0
    %203 = vmatprep.subr.mxu0 0.0
    %204 = vmatpush1.msra.mxu0 0.0
    %205 = vmatprep.subr.mxu0 0.0
    %206 = vmatpush1.msra.mxu0 0.0
    %207 = vmatprep.mubr.f32.mxu0 0.0
    %208 = vmatmul.mubr.f32.gmra.mrb[0].mxu0 %v132
    %v209 = vpop.f32.mrb[0].mxu0
    %v210 = vadd.f32 0.0, %v209
    %v211 = vpop.f32.mrb[0].mxu0
    %212 = vmatprep.mubr.f32.mxu0 0.0
    %213 = vmatmul.mubr.f32.gmra.mrb[0].mxu0 %v135
    %v214 = vpop.f32.mrb[0].mxu0
    %v215 = vadd.f32 0.0, %v214
    %v216 = vpop.f32.mrb[0].mxu0
    %217 = vmatprep.mubr.f32.mxu0 0.0
    %218 = vmatmul.mubr.f32.gmra.mrb[0].mxu0 %v138
    %v219 = vpop.f32.mrb[0].mxu0
    %v220 = vadd.f32 0.0, %v219
    %v221 = vpop.f32.mrb[0].mxu0
    %222 = vmatprep.mubr.f32.mxu0 0.0
    %223 = vmatmul.mubr.f32.gmra.mrb[0].mxu0 %v141
    %v224 = vpop.f32.mrb[0].mxu0
    %v225 = vadd.f32 0.0, %v224
    %v226 = vpop.f32.mrb[0].mxu0
    %227 = vdwg.mxu0
    %228 = vmatprep.subr.mxu0 0.0
    %229 = vmatpush1.msra.mxu0 %v125
    %230 = vmatprep.subr.mxu0 0.0
    %231 = vmatpush1.msra.mxu0 0.0
    %232 = vmatprep.subr.mxu0 0.0
    %233 = vmatpush1.msra.mxu0 0.0
    %234 = vmatprep.subr.mxu0 0.0
    %235 = vmatpush1.msra.mxu0 0.0
    %236 = vmatprep.subr.mxu0 0.0
    %237 = vmatpush1.msra.mxu0 0.0
    %238 = vmatprep.subr.mxu0 0.0
    %239 = vmatpush1.msra.mxu0 0.0
    %240 = vmatprep.subr.mxu0 0.0
    %241 = vmatpush1.msra.mxu0 0.0
    %242 = vmatprep.subr.mxu0 0.0
    %243 = vmatpush1.msra.mxu0 0.0
    %244 = vmatprep.subr.mxu0 0.0
    %245 = vmatpush1.msra.mxu0 0.0
    %246 = vmatprep.subr.mxu0 0.0
    %247 = vmatpush1.msra.mxu0 0.0
    %248 = vmatprep.subr.mxu0 0.0
    %249 = vmatpush1.msra.mxu0 0.0
    %250 = vmatprep.subr.mxu0 0.0
    %251 = vmatpush1.msra.mxu0 0.0
    %252 = vmatprep.subr.mxu0 0.0
    %253 = vmatpush1.msra.mxu0 0.0
    %254 = vmatprep.subr.mxu0 0.0
    %255 = vmatpush1.msra.mxu0 0.0
    %256 = vmatprep.subr.mxu0 0.0
    %257 = vmatpush1.msra.mxu0 0.0
    %258 = vmatprep.subr.mxu0 0.0
    %259 = vmatpush1.msra.mxu0 0.0
    %260 = vmatprep.subr.mxu0 0.0
    %261 = vmatpush1.msra.mxu0 0.0
    %262 = vmatprep.subr.mxu0 0.0
    %263 = vmatpush1.msra.mxu0 0.0
    %264 = vmatprep.subr.mxu0 0.0
    %265 = vmatpush1.msra.mxu0 0.0
    %266 = vmatprep.subr.mxu0 0.0
    %267 = vmatpush1.msra.mxu0 0.0
    %268 = vmatprep.subr.mxu0 0.0
    %269 = vmatpush1.msra.mxu0 0.0
    %270 = vmatprep.subr.mxu0 0.0
    %271 = vmatpush1.msra.mxu0 0.0
    %272 = vmatprep.subr.mxu0 0.0
    %273 = vmatpush1.msra.mxu0 0.0
    %274 = vmatprep.subr.mxu0 0.0
    %275 = vmatpush1.msra.mxu0 0.0
    %276 = vmatprep.subr.mxu0 0.0
    %277 = vmatpush1.msra.mxu0 0.0
    %278 = vmatprep.subr.mxu0 0.0
    %279 = vmatpush1.msra.mxu0 0.0
    %280 = vmatprep.subr.mxu0 0.0
    %281 = vmatpush1.msra.mxu0 0.0
    %282 = vmatprep.subr.mxu0 0.0
    %283 = vmatpush1.msra.mxu0 0.0
    %284 = vmatprep.subr.mxu0 0.0
    %285 = vmatpush1.msra.mxu0 0.0
    %286 = vmatprep.subr.mxu0 0.0
    %287 = vmatpush1.msra.mxu0 0.0
    %288 = vmatprep.subr.mxu0 0.0
    %289 = vmatpush1.msra.mxu0 0.0
    %290 = vmatprep.subr.mxu0 0.0
    %291 = vmatpush1.msra.mxu0 0.0
    %292 = vmatprep.mubr.f32.mxu0 0.0
    %293 = vmatmul.mubr.f32.gmra.mrb[0].mxu0 %v132
    %v294 = vpop.f32.mrb[0].mxu0
    %v295 = vadd.f32 0.0, %v294
    %v296 = vpop.f32.mrb[0].mxu0
    %297 = vmatprep.mubr.f32.mxu0 0.0
    %298 = vmatmul.mubr.f32.gmra.mrb[0].mxu0 %v135
    %v299 = vpop.f32.mrb[0].mxu0
    %v300 = vadd.f32 0.0, %v299
    %v301 = vpop.f32.mrb[0].mxu0
    %302 = vmatprep.mubr.f32.mxu0 0.0
    %303 = vmatmul.mubr.f32.gmra.mrb[0].mxu0 %v138
    %v304 = vpop.f32.mrb[0].mxu0
    %v305 = vadd.f32 0.0, %v304
    %v306 = vpop.f32.mrb[0].mxu0
    %307 = vmatprep.mubr.f32.mxu0 0.0
    %308 = vmatmul.mubr.f32.gmra.mrb[0].mxu0 %v141
    %v309 = vpop.f32.mrb[0].mxu0
    %v310 = vadd.f32 0.0, %v309
    %v311 = vpop.f32.mrb[0].mxu0
    %312 = vdwg.mxu0
    %313 = vst [vmem:[#allocation5] sm:$0xff] %v210
    %314 = vst [vmem:[#allocation5 + $0x8] sm:$0xff] %v215
    %315 = vst [vmem:[#allocation5 + $0x10] sm:$0xff] %v220
    %316 = vst [vmem:[#allocation5 + $0x18] sm:$0xff] %v225
    %317 = vst [vmem:[#allocation5 + $0x20] sm:$0xff] %v295
    %318 = vst [vmem:[#allocation5 + $0x28] sm:$0xff] %v300
    %319 = vst [vmem:[#allocation5 + $0x30] sm:$0xff] %v305
    %320 = vst [vmem:[#allocation5 + $0x38] sm:$0xff] %v310
    // Predicated region
    $region18: #{tpu_custom_call.1} parent=1 // pred_check
      _
    $region19: #{tpu_custom_call.1} parent=1 // pred_check_branch
      %322 = sbr.rel (0) target = $region21
    $region20: #{tpu_custom_call.1} parent=1 // pred_region
      %s324 = ssub.s32 1024, 1024
      %325 = vsyncadd [#allocation4], %s324
      %s326 = sshll.u32 [#allocation5], 4
      %s327 = int_to_ptr.vmem [resolvable:$true] %s326
      %332 = dma.vmem_to_hbm [thread:$0]  %s327, 1024, %s3, [#allocation4], 128, 128, 8
    $region21: #{tpu_custom_call.1} parent=1 // pred_fallthru
      _
    // Predicated region
    $region22: #{tpu_custom_call.1} parent=1 // pred_check
      _
    $region23: #{tpu_custom_call.1} parent=1 // pred_check_branch
      %334 = sbr.rel (0) target = $region25
    $region24: #{tpu_custom_call.1} parent=1 // pred_region
      %335 = dma.done [#allocation4], 1024
    $region25: #{tpu_custom_call.1} parent=1 // pred_fallthru
      _
    %336 = vsyncpa [#allocation3], 1
    %337 = vsyncpa [#allocation4], 1

</llo_original>
